<compile_context>
chip_gen: v6e
topology: v6e:2x2x1
jax: 0.10.0
libtpu: 0.0.40
codegen_flags: <defaults>
</compile_context>

<pallas_src>
import math
import functools

import jax
import jax.numpy as jnp
from jax.experimental import pallas as pl
from jax.experimental.pallas import tpu as pltpu

BN_EPS = 1e-5


def _round_up(n, m):
    return ((n + m - 1) // m) * m


# ----------------------------------------------------------------------------
# Kernel: one batch tile, BN already folded into (W, b).
# ----------------------------------------------------------------------------
def feat_l_kirc_kernel(x_ref, w1_ref, b1_ref, w2_ref, b2_ref, w3_ref, b3_ref,
                       o_ref):
    cd = w1_ref.dtype  # MXU operand dtype (bf16 perf path or f32 exact path)

    h = x_ref[...].astype(cd)

    # Layer 1: Linear(12 -> 128) [+ folded BN] + ReLU   (Dropout p=0.5: identity)
    h = jnp.dot(h, w1_ref[...], preferred_element_type=jnp.float32) + b1_ref[...]
    h = jnp.maximum(h, 0.0)

    # Layer 2: Linear(128 -> 128) [+ folded BN] + ReLU  (Dropout p=0.7: identity)
    h = jnp.dot(h.astype(cd), w2_ref[...],
                preferred_element_type=jnp.float32) + b2_ref[...]
    h = jnp.maximum(h, 0.0)

    # Layer 3: Linear(128 -> 64) [+ folded BN] + ReLU
    h = jnp.dot(h.astype(cd), w3_ref[...],
                preferred_element_type=jnp.float32) + b3_ref[...]
    h = jnp.maximum(h, 0.0)

    o_ref[...] = h.astype(o_ref.dtype)


# ----------------------------------------------------------------------------
# Wrapper
# ----------------------------------------------------------------------------
def fold_bn_into_linear(params, compute_dtype=jnp.float32):
    """params: 18-tuple (w, b, gamma, beta, mean, var) x 3 layers.
    Returns (w1, b1, w2, b2, w3, b3) with eval-mode BatchNorm folded in.
    Weights are cast to `compute_dtype` (bf16 => native MXU on v6e/v7x);
    biases stay f32 (added after the f32 matmul accumulation)."""
    folded = []
    for i in range(3):
        w, b, g, be, m, v = params[6 * i:6 * i + 6]
        scale = g * jax.lax.rsqrt(v + BN_EPS)             # (1, out)
        w_f = (w * scale).astype(compute_dtype)           # (in, out)
        b_f = ((b - m) * scale + be).astype(jnp.float32)  # (1, out)
        folded += [w_f, b_f]
    return tuple(folded)


@functools.partial(jax.jit, static_argnames=("tb",))
def feat_l_kirc_forward(x, folded_params, *, tb=4096):
    """x: [B, 12] float32. folded_params: output of fold_bn_into_linear."""
    B = x.shape[0]
    # Batch tile: multiple of 8 sublanes, capped at `tb`.
    TB = min(tb, _round_up(B, 8))
    Bp = _round_up(B, TB)
    if Bp != B:
        x = jnp.pad(x, ((0, Bp - B), (0, 0)))

    w1, b1, w2, b2, w3, b3 = folded_params
    const_map = lambda i: (0, 0)   # weights stay VMEM-resident across steps

    out = pl.pallas_call(
        feat_l_kirc_kernel,
        out_shape=jax.ShapeDtypeStruct((Bp, 64), jnp.float32),
        grid=(Bp // TB,),
        in_specs=[
            pl.BlockSpec((TB, 12), lambda i: (i, 0)),
            pl.BlockSpec(w1.shape, const_map),
            pl.BlockSpec(b1.shape, const_map),
            pl.BlockSpec(w2.shape, const_map),
            pl.BlockSpec(b2.shape, const_map),
            pl.BlockSpec(w3.shape, const_map),
            pl.BlockSpec(b3.shape, const_map),
        ],
        out_specs=pl.BlockSpec((TB, 64), lambda i: (i, 0)),
        compiler_params=pltpu.CompilerParams(
            dimension_semantics=("parallel",)),
    )(x, w1, b1, w2, b2, w3, b3)
    return out[:B]


# ----------------------------------------------------------------------------
# Parameter construction (mirrors the PyTorch module init) + pure-JAX reference
# ----------------------------------------------------------------------------
def _xavier_uniform(key, fan_in, fan_out):
    bound = math.sqrt(6.0 / (fan_in + fan_out))
    w = jax.random.uniform(key, (fan_out, fan_in), jnp.float32, -bound, bound)
    return w.T  # store as [in, out] so the kernel does y = x @ W + b


def _linear_bias(key, fan_in, fan_out):
    bound = 1.0 / math.sqrt(fan_in)
    return jax.random.uniform(key, (1, fan_out), jnp.float32, -bound, bound)


def make_params(key):
    dims = [(12, 128), (128, 128), (128, 64)]
    keys = jax.random.split(key, 2 * len(dims))
    params = []
    for i, (fi, fo) in enumerate(dims):
        w = _xavier_uniform(keys[2 * i], fi, fo)
        b = _linear_bias(keys[2 * i + 1], fi, fo)
        gamma = jnp.ones((1, fo), jnp.float32)   # BN weight
        beta = jnp.zeros((1, fo), jnp.float32)   # BN bias
        mean = jnp.zeros((1, fo), jnp.float32)   # running_mean
        var = jnp.ones((1, fo), jnp.float32)     # running_var
        params += [w, b, gamma, beta, mean, var]
    return tuple(params)


def reference_forward(x, params):
    """Pure-JAX reference matching the PyTorch eval-mode math (BN un-folded)."""
    h = x
    for i in range(3):
        w, b, g, be, m, v = params[6 * i:6 * i + 6]
        h = h @ w + b
        h = (h - m) * (g / jnp.sqrt(v + BN_EPS)) + be
        h = jnp.maximum(h, 0.0)
    return h


if __name__ == "__main__":
    key = jax.random.PRNGKey(0)
    k_params, k_x = jax.random.split(key)
    params = make_params(k_params)

    B = 8
    x = jax.random.normal(k_x, (B, 12), jnp.float32)
    ref = reference_forward(x, params)

    # Exact path: f32 MXU operands (tight tolerance).
    out_f32 = feat_l_kirc_forward(x, fold_bn_into_linear(params, jnp.float32))
    out_f32 = jax.block_until_ready(out_f32)
    assert out_f32.shape == (B, 64)
    assert jnp.allclose(out_f32, ref, atol=1e-4, rtol=1e-4), "f32 path mismatch"

    # Perf path (v6e/v7x): bf16 MXU operands, f32 accumulation.
    out_bf16 = feat_l_kirc_forward(x, fold_bn_into_linear(params, jnp.bfloat16))
    out_bf16 = jax.block_until_ready(out_bf16)
    assert out_bf16.shape == (B, 64)
    assert jnp.allclose(out_bf16, ref, atol=5e-2, rtol=5e-2), "bf16 path mismatch"

    # Exercise a multi-tile grid (padding + pipelining path) as well.
    B2 = 5000
    x2 = jax.random.normal(k_x, (B2, 12), jnp.float32)
    out2 = feat_l_kirc_forward(x2, fold_bn_into_linear(params, jnp.float32))
    out2 = jax.block_until_ready(out2)
    assert out2.shape == (B2, 64)
    assert jnp.allclose(out2, reference_forward(x2, params), atol=1e-3, rtol=1e-3)

    print("KERNEL_OK")
</pallas_src>

<mosaic_0001>
module attributes {stable_mosaic.version = 11 : i64} {
  func.func @feat_l_kirc_kernel(%arg0: i32, %arg1: memref<8x12xf32, #tpu.memory_space<vmem>>, %arg2: memref<12x128xf32, #tpu.memory_space<vmem>>, %arg3: memref<1x128xf32, #tpu.memory_space<vmem>>, %arg4: memref<128x128xf32, #tpu.memory_space<vmem>>, %arg5: memref<1x128xf32, #tpu.memory_space<vmem>>, %arg6: memref<128x64xf32, #tpu.memory_space<vmem>>, %arg7: memref<1x64xf32, #tpu.memory_space<vmem>>, %arg8: memref<8x64xf32, #tpu.memory_space<vmem>>) attributes {dimension_semantics = [#tpu.dimension_semantics<parallel>], iteration_bounds = array<i64: 1>, scalar_prefetch = 0 : i64, scratch_operands = 0 : i64, tpu.core_type = #tpu.core_type<tc>, window_params = [{transform_indices = @transform_0, window_bounds = array<i64: 8, 12>}, {pipeline_mode = #tpu.pipeline_mode<synchronous>, transform_indices = @transform_1, window_bounds = array<i64: 12, 128>}, {pipeline_mode = #tpu.pipeline_mode<synchronous>, transform_indices = @transform_2, window_bounds = array<i64: 1, 128>}, {pipeline_mode = #tpu.pipeline_mode<synchronous>, transform_indices = @transform_3, window_bounds = array<i64: 128, 128>}, {pipeline_mode = #tpu.pipeline_mode<synchronous>, transform_indices = @transform_4, window_bounds = array<i64: 1, 128>}, {pipeline_mode = #tpu.pipeline_mode<synchronous>, transform_indices = @transform_5, window_bounds = array<i64: 128, 64>}, {pipeline_mode = #tpu.pipeline_mode<synchronous>, transform_indices = @transform_6, window_bounds = array<i64: 1, 64>}, {transform_indices = @transform_7, window_bounds = array<i64: 8, 64>}]} {
    %c0 = arith.constant 0 : index
    %c0_0 = arith.constant 0 : index
    %0 = vector.load %arg1[%c0, %c0_0] : memref<8x12xf32, #tpu.memory_space<vmem>>, vector<8x12xf32>
    %c0_1 = arith.constant 0 : index
    %c0_2 = arith.constant 0 : index
    %1 = vector.load %arg2[%c0_1, %c0_2] : memref<12x128xf32, #tpu.memory_space<vmem>>, vector<12x128xf32>
    %cst = arith.constant dense<0.000000e+00> : vector<8x128xf32>
    %2 = tpu.matmul %0, %1, %cst {dimension_numbers = #tpu.dot_dimension_numbers<[1], [0], [0], [1], [0, 0, 1, 1], [], []>} : vector<8x12xf32>, vector<12x128xf32>, vector<8x128xf32> -> vector<8x128xf32>
    %c0_3 = arith.constant 0 : index
    %c0_4 = arith.constant 0 : index
    %3 = vector.load %arg3[%c0_3, %c0_4] : memref<1x128xf32, #tpu.memory_space<vmem>>, vector<1x128xf32>
    %4 = vector.broadcast %3 : vector<1x128xf32> to vector<8x128xf32>
    %5 = arith.addf %2, %4 : vector<8x128xf32>
    %cst_5 = arith.constant 0.000000e+00 : f32
    %6 = vector.broadcast %cst_5 : f32 to vector<8x128xf32>
    %7 = arith.maximumf %5, %6 : vector<8x128xf32>
    %c0_6 = arith.constant 0 : index
    %c0_7 = arith.constant 0 : index
    %8 = vector.load %arg4[%c0_6, %c0_7] : memref<128x128xf32, #tpu.memory_space<vmem>>, vector<128x128xf32>
    %cst_8 = arith.constant dense<0.000000e+00> : vector<8x128xf32>
    %9 = tpu.matmul %7, %8, %cst_8 {dimension_numbers = #tpu.dot_dimension_numbers<[1], [0], [0], [1], [0, 0, 1, 1], [], []>} : vector<8x128xf32>, vector<128x128xf32>, vector<8x128xf32> -> vector<8x128xf32>
    %c0_9 = arith.constant 0 : index
    %c0_10 = arith.constant 0 : index
    %10 = vector.load %arg5[%c0_9, %c0_10] : memref<1x128xf32, #tpu.memory_space<vmem>>, vector<1x128xf32>
    %11 = vector.broadcast %10 : vector<1x128xf32> to vector<8x128xf32>
    %12 = arith.addf %9, %11 : vector<8x128xf32>
    %cst_11 = arith.constant 0.000000e+00 : f32
    %13 = vector.broadcast %cst_11 : f32 to vector<8x128xf32>
    %14 = arith.maximumf %12, %13 : vector<8x128xf32>
    %c0_12 = arith.constant 0 : index
    %c0_13 = arith.constant 0 : index
    %15 = vector.load %arg6[%c0_12, %c0_13] : memref<128x64xf32, #tpu.memory_space<vmem>>, vector<128x64xf32>
    %cst_14 = arith.constant dense<0.000000e+00> : vector<8x64xf32>
    %16 = tpu.matmul %14, %15, %cst_14 {dimension_numbers = #tpu.dot_dimension_numbers<[1], [0], [0], [1], [0, 0, 1, 1], [], []>} : vector<8x128xf32>, vector<128x64xf32>, vector<8x64xf32> -> vector<8x64xf32>
    %c0_15 = arith.constant 0 : index
    %c0_16 = arith.constant 0 : index
    %17 = vector.load %arg7[%c0_15, %c0_16] : memref<1x64xf32, #tpu.memory_space<vmem>>, vector<1x64xf32>
    %18 = vector.broadcast %17 : vector<1x64xf32> to vector<8x64xf32>
    %19 = arith.addf %16, %18 : vector<8x64xf32>
    %cst_17 = arith.constant 0.000000e+00 : f32
    %20 = vector.broadcast %cst_17 : f32 to vector<8x64xf32>
    %21 = arith.maximumf %19, %20 : vector<8x64xf32>
    %c0_18 = arith.constant 0 : index
    %c0_19 = arith.constant 0 : index
    %22 = vector.load %arg8[%c0_18, %c0_19] : memref<8x64xf32, #tpu.memory_space<vmem>>, vector<8x64xf32>
    tpu.vector_store %arg8[%c0_18, %c0_19], %21 {strides = array<i32>} : memref<8x64xf32, #tpu.memory_space<vmem>>, vector<8x64xf32>,
    return
  }
  func.func @transform_0(%arg0: i32) -> (i32, i32) {
    %c0_i32 = arith.constant 0 : i32
    %c0_i32_0 = arith.constant 0 : i32
    return %arg0, %c0_i32 : i32, i32
  }
  func.func @transform_1(%arg0: i32) -> (i32, i32) {
    %c0_i32 = arith.constant 0 : i32
    %c0_i32_0 = arith.constant 0 : i32
    %c0_i32_1 = arith.constant 0 : i32
    return %c0_i32, %c0_i32_0 : i32, i32
  }
  func.func @transform_2(%arg0: i32) -> (i32, i32) {
    %c0_i32 = arith.constant 0 : i32
    %c0_i32_0 = arith.constant 0 : i32
    %c0_i32_1 = arith.constant 0 : i32
    return %c0_i32, %c0_i32_0 : i32, i32
  }
  func.func @transform_3(%arg0: i32) -> (i32, i32) {
    %c0_i32 = arith.constant 0 : i32
    %c0_i32_0 = arith.constant 0 : i32
    %c0_i32_1 = arith.constant 0 : i32
    return %c0_i32, %c0_i32_0 : i32, i32
  }
  func.func @transform_4(%arg0: i32) -> (i32, i32) {
    %c0_i32 = arith.constant 0 : i32
    %c0_i32_0 = arith.constant 0 : i32
    %c0_i32_1 = arith.constant 0 : i32
    return %c0_i32, %c0_i32_0 : i32, i32
  }
  func.func @transform_5(%arg0: i32) -> (i32, i32) {
    %c0_i32 = arith.constant 0 : i32
    %c0_i32_0 = arith.constant 0 : i32
    %c0_i32_1 = arith.constant 0 : i32
    return %c0_i32, %c0_i32_0 : i32, i32
  }
  func.func @transform_6(%arg0: i32) -> (i32, i32) {
    %c0_i32 = arith.constant 0 : i32
    %c0_i32_0 = arith.constant 0 : i32
    %c0_i32_1 = arith.constant 0 : i32
    return %c0_i32, %c0_i32_0 : i32, i32
  }
  func.func @transform_7(%arg0: i32) -> (i32, i32) {
    %c0_i32 = arith.constant 0 : i32
    %c0_i32_0 = arith.constant 0 : i32
    return %arg0, %c0_i32 : i32, i32
  }
}

</mosaic_0001>

<llo_original>
// kernel: feat_l_kirc_forward.1
$region0: #{feat_l_kirc_forward.1}
  #allocation0 [shape = 'u32[]', space=smem, size = 0x4, offset = 0x4, fixed_abs, tag = 'smem constant byte address 0x4 - core index']
  #allocation1 [shape = 'u32[144,128]{1,0:T(1,128)}', space=vmem, size = 0x12000, scoped, tag = 'internal scratch']
  %s0 = inlined_call_operand.vmem [shape: f32[8,12], index: 0, kind: input, shape index: {}]
  %s1 = inlined_call_operand.vmem [shape: f32[12,128], index: 1, kind: input, shape index: {}]
  %s2 = inlined_call_operand.vmem [shape: f32[1,128], index: 2, kind: input, shape index: {}]
  %s3 = inlined_call_operand.vmem [shape: f32[128,128], index: 3, kind: input, shape index: {}]
  %s4 = inlined_call_operand.vmem [shape: f32[1,128], index: 4, kind: input, shape index: {}]
  %s5 = inlined_call_operand.vmem [shape: f32[128,64], index: 5, kind: input, shape index: {}]
  %s6 = inlined_call_operand.vmem [shape: f32[1,64], index: 6, kind: input, shape index: {}]
  %s7 = inlined_call_operand.hbm [shape: f32[8,64], index: 7, kind: output, shape index: {}]
  %s8 = sld [smem:[#allocation0]]
  $region38: #{feat_l_kirc_forward.1} parent=0
    _
  %s10 = ssub.s32 1, %s8
  %s11 = scalar_select 0, %s10, %s8
  $region1: #{feat_l_kirc_forward.1} parent=0
    #allocation2 [shape = 'u8[4096]{0}', space=vmem, size = 0x1000, scoped, tag = 'output window, operand 0, single buffered']
    #allocation3 [shape = 's32[1]{0}', space=sflag, size = 0x4, scoped, tag = 'scoped memory for feat_l_kirc_forward.1']
    %12 = vsyncpa [#allocation3], 0
    // Predicated region
    $region2: #{feat_l_kirc_forward.1} parent=1 // pred_check
      _
    $region3: #{feat_l_kirc_forward.1} parent=1 // pred_check_branch
      %14 = sbr.rel (0) target = $region5
    $region4: #{feat_l_kirc_forward.1} parent=1 // pred_region
      _
    $region5: #{feat_l_kirc_forward.1} parent=1 // pred_fallthru
      _
    // Predicated region
    $region6: #{feat_l_kirc_forward.1} parent=1 // pred_check
      _
    $region7: #{feat_l_kirc_forward.1} parent=1 // pred_check_branch
      %16 = sbr.rel (0) target = $region9
    $region8: #{feat_l_kirc_forward.1} parent=1 // pred_region
      _
    $region9: #{feat_l_kirc_forward.1} parent=1 // pred_fallthru
      _
    // Predicated region
    $region10: #{feat_l_kirc_forward.1} parent=1 // pred_check
      _
    $region11: #{feat_l_kirc_forward.1} parent=1 // pred_check_branch
      %18 = sbr.rel (0) target = $region13
    $region12: #{feat_l_kirc_forward.1} parent=1 // pred_region
      _
    $region13: #{feat_l_kirc_forward.1} parent=1 // pred_fallthru
      _
    // Predicated region
    $region14: #{feat_l_kirc_forward.1} parent=1 // pred_check
      _
    $region15: #{feat_l_kirc_forward.1} parent=1 // pred_check_branch
      %20 = sbr.rel (0) target = $region17
    $region16: #{feat_l_kirc_forward.1} parent=1 // pred_region
      _
    $region17: #{feat_l_kirc_forward.1} parent=1 // pred_fallthru
      _
    // Predicated region
    $region18: #{feat_l_kirc_forward.1} parent=1 // pred_check
      _
    $region19: #{feat_l_kirc_forward.1} parent=1 // pred_check_branch
      %22 = sbr.rel (0) target = $region21
    $region20: #{feat_l_kirc_forward.1} parent=1 // pred_region
      _
    $region21: #{feat_l_kirc_forward.1} parent=1 // pred_fallthru
      _
    // Predicated region
    $region22: #{feat_l_kirc_forward.1} parent=1 // pred_check
      _
    $region23: #{feat_l_kirc_forward.1} parent=1 // pred_check_branch
      %24 = sbr.rel (0) target = $region25
    $region24: #{feat_l_kirc_forward.1} parent=1 // pred_region
      _
    $region25: #{feat_l_kirc_forward.1} parent=1 // pred_fallthru
      _
    // Predicated region
    $region26: #{feat_l_kirc_forward.1} parent=1 // pred_check
      _
    $region27: #{feat_l_kirc_forward.1} parent=1 // pred_check_branch
      %26 = sbr.rel (0) target = $region29
    $region28: #{feat_l_kirc_forward.1} parent=1 // pred_region
      _
    $region29: #{feat_l_kirc_forward.1} parent=1 // pred_fallthru
      _
    %v27 = vld [vmem:[%s0] sm:$0xff]
    %v28 = vld [vmem:[%s1] sm:$0xff]
    %v29 = vld [vmem:[%s1 + $0x8] sm:$0xf]
    %v30 = vld [vmem:[%s2] sm:$0x1]
    %v32 = vlaneseq
    %v33 = vshrl.u32 %v32, 7
    %v34 = vsub.s32 0, %v33
    %v35 = vrot.slane %v30, %v34
    %vm37 = vcmask 97280
    %v39 = vsel %vm37, %v27, 0
    %vm41 = vcmask 1043456
    %v43 = vsel %vm41, %v29, 0
    %45 = vmatprep.subr.mxu0 0.0
    %46 = vmatpush1.msra.mxu0 0.0
    %47 = vmatprep.subr.mxu0 0.0
    %48 = vmatpush1.msra.mxu0 0.0
    %49 = vmatprep.subr.mxu0 0.0
    %50 = vmatpush1.msra.mxu0 0.0
    %51 = vmatprep.subr.mxu0 0.0
    %52 = vmatpush1.msra.mxu0 0.0
    %53 = vmatprep.subr.mxu0 0.0
    %54 = vmatpush1.msra.mxu0 0.0
    %55 = vmatprep.subr.mxu0 0.0
    %56 = vmatpush1.msra.mxu0 0.0
    %57 = vmatprep.subr.mxu0 0.0
    %58 = vmatpush1.msra.mxu0 0.0
    %59 = vmatprep.subr.mxu0 0.0
    %60 = vmatpush1.msra.mxu0 0.0
    %61 = vmatprep.subr.mxu0 0.0
    %62 = vmatpush1.msra.mxu0 0.0
    %63 = vmatprep.subr.mxu0 0.0
    %64 = vmatpush1.msra.mxu0 0.0
    %65 = vmatprep.subr.mxu0 0.0
    %66 = vmatpush1.msra.mxu0 0.0
    %67 = vmatprep.subr.mxu0 0.0
    %68 = vmatpush1.msra.mxu0 0.0
    %69 = vmatprep.subr.mxu0 0.0
    %70 = vmatpush1.msra.mxu0 0.0
    %71 = vmatprep.subr.mxu0 0.0
    %72 = vmatpush1.msra.mxu0 0.0
    %73 = vmatprep.subr.mxu0 0.0
    %74 = vmatpush1.msra.mxu0 %v43
    %75 = vmatprep.subr.mxu0 0.0
    %76 = vmatpush1.msra.mxu0 %v28
    %77 = vmatprep.subr.mxu0 0.0
    %78 = vmatpush2.msra.mxu0 0.0
    %79 = vmatprep.subr.mxu0 0.0
    %80 = vmatpush2.msra.mxu0 0.0
    %81 = vmatprep.subr.mxu0 0.0
    %82 = vmatpush2.msra.mxu0 0.0
    %83 = vmatprep.subr.mxu0 0.0
    %84 = vmatpush2.msra.mxu0 0.0
    %85 = vmatprep.subr.mxu0 0.0
    %86 = vmatpush2.msra.mxu0 0.0
    %87 = vmatprep.subr.mxu0 0.0
    %88 = vmatpush2.msra.mxu0 0.0
    %89 = vmatprep.subr.mxu0 0.0
    %90 = vmatpush2.msra.mxu0 0.0
    %91 = vmatprep.subr.mxu0 0.0
    %92 = vmatpush2.msra.mxu0 0.0
    %93 = vmatprep.subr.mxu0 0.0
    %94 = vmatpush2.msra.mxu0 0.0
    %95 = vmatprep.subr.mxu0 0.0
    %96 = vmatpush2.msra.mxu0 0.0
    %97 = vmatprep.subr.mxu0 0.0
    %98 = vmatpush2.msra.mxu0 0.0
    %99 = vmatprep.subr.mxu0 0.0
    %100 = vmatpush2.msra.mxu0 0.0
    %101 = vmatprep.subr.mxu0 0.0
    %102 = vmatpush2.msra.mxu0 0.0
    %103 = vmatprep.subr.mxu0 0.0
    %104 = vmatpush2.msra.mxu0 0.0
    %105 = vmatprep.subr.mxu0 0.0
    %106 = vmatpush2.msra.mxu0 0.0
    %107 = vmatprep.subr.mxu0 0.0
    %108 = vmatpush2.msra.mxu0 0.0
    %109 = vmatprep.mubr.f32.mxu0 0.0
    %110 = vmatmul.mubr.f32.gmra.mxu0 %v39
    %v111 = vpop.f32.mrf.mxu0
    %v112 = vadd.f32 %v35, %v111
    %v113 = vpop.f32.mrf.mxu0
    %114 = vdwg.mxu0
    %v115 = vmax.f32 %v112, 0.0
    %v116 = vld [vmem:[%s3] sm:$0xff]
    %v117 = vld [vmem:[%s3 + $0x8] sm:$0xff]
    %v118 = vld [vmem:[%s3 + $0x10] sm:$0xff]
    %v119 = vld [vmem:[%s3 + $0x18] sm:$0xff]
    %v120 = vld [vmem:[%s3 + $0x20] sm:$0xff]
    %v121 = vld [vmem:[%s3 + $0x28] sm:$0xff]
    %v122 = vld [vmem:[%s3 + $0x30] sm:$0xff]
    %v123 = vld [vmem:[%s3 + $0x38] sm:$0xff]
    %v124 = vld [vmem:[%s3 + $0x40] sm:$0xff]
    %v125 = vld [vmem:[%s3 + $0x48] sm:$0xff]
    %v126 = vld [vmem:[%s3 + $0x50] sm:$0xff]
    %v127 = vld [vmem:[%s3 + $0x58] sm:$0xff]
    %v128 = vld [vmem:[%s3 + $0x60] sm:$0xff]
    %v129 = vld [vmem:[%s3 + $0x68] sm:$0xff]
    %v130 = vld [vmem:[%s3 + $0x70] sm:$0xff]
    %v131 = vld [vmem:[%s3 + $0x78] sm:$0xff]
    %v132 = vld [vmem:[%s4] sm:$0x1]
    %v134 = vlaneseq
    %v135 = vshrl.u32 %v134, 7
    %v136 = vsub.s32 0, %v135
    %v137 = vrot.slane %v132, %v136
    %139 = vmatprep.subr.mxu0 0.0
    %140 = vmatpush1.msra.mxu0 %v131
    %141 = vmatprep.subr.mxu0 0.0
    %142 = vmatpush1.msra.mxu0 %v130
    %143 = vmatprep.subr.mxu0 0.0
    %144 = vmatpush1.msra.mxu0 %v129
    %145 = vmatprep.subr.mxu0 0.0
    %146 = vmatpush1.msra.mxu0 %v128
    %147 = vmatprep.subr.mxu0 0.0
    %148 = vmatpush1.msra.mxu0 %v127
    %149 = vmatprep.subr.mxu0 0.0
    %150 = vmatpush1.msra.mxu0 %v126
    %151 = vmatprep.subr.mxu0 0.0
    %152 = vmatpush1.msra.mxu0 %v125
    %153 = vmatprep.subr.mxu0 0.0
    %154 = vmatpush1.msra.mxu0 %v124
    %155 = vmatprep.subr.mxu0 0.0
    %156 = vmatpush1.msra.mxu0 %v123
    %157 = vmatprep.subr.mxu0 0.0
    %158 = vmatpush1.msra.mxu0 %v122
    %159 = vmatprep.subr.mxu0 0.0
    %160 = vmatpush1.msra.mxu0 %v121
    %161 = vmatprep.subr.mxu0 0.0
    %162 = vmatpush1.msra.mxu0 %v120
    %163 = vmatprep.subr.mxu0 0.0
    %164 = vmatpush1.msra.mxu0 %v119
    %165 = vmatprep.subr.mxu0 0.0
    %166 = vmatpush1.msra.mxu0 %v118
    %167 = vmatprep.subr.mxu0 0.0
    %168 = vmatpush1.msra.mxu0 %v117
    %169 = vmatprep.subr.mxu0 0.0
    %170 = vmatpush1.msra.mxu0 %v116
    %171 = vmatprep.subr.mxu0 0.0
    %172 = vmatpush2.msra.mxu0 0.0
    %173 = vmatprep.subr.mxu0 0.0
    %174 = vmatpush2.msra.mxu0 0.0
    %175 = vmatprep.subr.mxu0 0.0
    %176 = vmatpush2.msra.mxu0 0.0
    %177 = vmatprep.subr.mxu0 0.0
    %178 = vmatpush2.msra.mxu0 0.0
    %179 = vmatprep.subr.mxu0 0.0
    %180 = vmatpush2.msra.mxu0 0.0
    %181 = vmatprep.subr.mxu0 0.0
    %182 = vmatpush2.msra.mxu0 0.0
    %183 = vmatprep.subr.mxu0 0.0
    %184 = vmatpush2.msra.mxu0 0.0
    %185 = vmatprep.subr.mxu0 0.0
    %186 = vmatpush2.msra.mxu0 0.0
    %187 = vmatprep.subr.mxu0 0.0
    %188 = vmatpush2.msra.mxu0 0.0
    %189 = vmatprep.subr.mxu0 0.0
    %190 = vmatpush2.msra.mxu0 0.0
    %191 = vmatprep.subr.mxu0 0.0
    %192 = vmatpush2.msra.mxu0 0.0
    %193 = vmatprep.subr.mxu0 0.0
    %194 = vmatpush2.msra.mxu0 0.0
    %195 = vmatprep.subr.mxu0 0.0
    %196 = vmatpush2.msra.mxu0 0.0
    %197 = vmatprep.subr.mxu0 0.0
    %198 = vmatpush2.msra.mxu0 0.0
    %199 = vmatprep.subr.mxu0 0.0
    %200 = vmatpush2.msra.mxu0 0.0
    %201 = vmatprep.subr.mxu0 0.0
    %202 = vmatpush2.msra.mxu0 0.0
    %203 = vmatprep.mubr.f32.mxu0 0.0
    %204 = vmatmul.mubr.f32.gmra.mxu0 %v115
    %v205 = vpop.f32.mrf.mxu0
    %v206 = vadd.f32 %v137, %v205
    %v207 = vpop.f32.mrf.mxu0
    %208 = vdwg.mxu0
    %v209 = vmax.f32 %v206, 0.0
    %v210 = vld [vmem:[%s5] sm:$0xff]
    %v211 = vld [vmem:[%s5 + $0x8] sm:$0xff]
    %v212 = vld [vmem:[%s5 + $0x10] sm:$0xff]
    %v213 = vld [vmem:[%s5 + $0x18] sm:$0xff]
    %v214 = vld [vmem:[%s5 + $0x20] sm:$0xff]
    %v215 = vld [vmem:[%s5 + $0x28] sm:$0xff]
    %v216 = vld [vmem:[%s5 + $0x30] sm:$0xff]
    %v217 = vld [vmem:[%s5 + $0x38] sm:$0xff]
    %v218 = vld [vmem:[%s5 + $0x40] sm:$0xff]
    %v219 = vld [vmem:[%s5 + $0x48] sm:$0xff]
    %v220 = vld [vmem:[%s5 + $0x50] sm:$0xff]
    %v221 = vld [vmem:[%s5 + $0x58] sm:$0xff]
    %v222 = vld [vmem:[%s5 + $0x60] sm:$0xff]
    %v223 = vld [vmem:[%s5 + $0x68] sm:$0xff]
    %v224 = vld [vmem:[%s5 + $0x70] sm:$0xff]
    %v225 = vld [vmem:[%s5 + $0x78] sm:$0xff]
    %v226 = vld [vmem:[%s6] sm:$0x1]
    %v228 = vlaneseq
    %v229 = vshrl.u32 %v228, 7
    %v230 = vsub.s32 0, %v229
    %v231 = vrot.slane %v226, %v230
    %233 = vmatprep.subr.mxu0 0.0
    %234 = vmatpush1.msra.mxu0 %v225
    %235 = vmatprep.subr.mxu0 0.0
    %236 = vmatpush1.msra.mxu0 %v224
    %237 = vmatprep.subr.mxu0 0.0
    %238 = vmatpush1.msra.mxu0 %v223
    %239 = vmatprep.subr.mxu0 0.0
    %240 = vmatpush1.msra.mxu0 %v222
    %241 = vmatprep.subr.mxu0 0.0
    %242 = vmatpush1.msra.mxu0 %v221
    %243 = vmatprep.subr.mxu0 0.0
    %244 = vmatpush1.msra.mxu0 %v220
    %245 = vmatprep.subr.mxu0 0.0
    %246 = vmatpush1.msra.mxu0 %v219
    %247 = vmatprep.subr.mxu0 0.0
    %248 = vmatpush1.msra.mxu0 %v218
    %249 = vmatprep.subr.mxu0 0.0
    %250 = vmatpush1.msra.mxu0 %v217
    %251 = vmatprep.subr.mxu0 0.0
    %252 = vmatpush1.msra.mxu0 %v216
    %253 = vmatprep.subr.mxu0 0.0
    %254 = vmatpush1.msra.mxu0 %v215
    %255 = vmatprep.subr.mxu0 0.0
    %256 = vmatpush1.msra.mxu0 %v214
    %257 = vmatprep.subr.mxu0 0.0
    %258 = vmatpush1.msra.mxu0 %v213
    %259 = vmatprep.subr.mxu0 0.0
    %260 = vmatpush1.msra.mxu0 %v212
    %261 = vmatprep.subr.mxu0 0.0
    %262 = vmatpush1.msra.mxu0 %v211
    %263 = vmatprep.subr.mxu0 0.0
    %264 = vmatpush1.msra.mxu0 %v210
    %265 = vmatprep.subr.mxu0 0.0
    %266 = vmatpush2.msra.mxu0 0.0
    %267 = vmatprep.subr.mxu0 0.0
    %268 = vmatpush2.msra.mxu0 0.0
    %269 = vmatprep.subr.mxu0 0.0
    %270 = vmatpush2.msra.mxu0 0.0
    %271 = vmatprep.subr.mxu0 0.0
    %272 = vmatpush2.msra.mxu0 0.0
    %273 = vmatprep.subr.mxu0 0.0
    %274 = vmatpush2.msra.mxu0 0.0
    %275 = vmatprep.subr.mxu0 0.0
    %276 = vmatpush2.msra.mxu0 0.0
    %277 = vmatprep.subr.mxu0 0.0
    %278 = vmatpush2.msra.mxu0 0.0
    %279 = vmatprep.subr.mxu0 0.0
    %280 = vmatpush2.msra.mxu0 0.0
    %281 = vmatprep.subr.mxu0 0.0
    %282 = vmatpush2.msra.mxu0 0.0
    %283 = vmatprep.subr.mxu0 0.0
    %284 = vmatpush2.msra.mxu0 0.0
    %285 = vmatprep.subr.mxu0 0.0
    %286 = vmatpush2.msra.mxu0 0.0
    %287 = vmatprep.subr.mxu0 0.0
    %288 = vmatpush2.msra.mxu0 0.0
    %289 = vmatprep.subr.mxu0 0.0
    %290 = vmatpush2.msra.mxu0 0.0
    %291 = vmatprep.subr.mxu0 0.0
    %292 = vmatpush2.msra.mxu0 0.0
    %293 = vmatprep.subr.mxu0 0.0
    %294 = vmatpush2.msra.mxu0 0.0
    %295 = vmatprep.subr.mxu0 0.0
    %296 = vmatpush2.msra.mxu0 0.0
    %297 = vmatprep.mubr.f32.mxu0 0.0
    %298 = vmatmul.mubr.f32.gmra.mxu0 %v209
    %v299 = vpop.f32.mrf.mxu0
    %v300 = vadd.f32 %v231, %v299
    %v301 = vpop.f32.mrf.mxu0
    %302 = vdwg.mxu0
    %v303 = vmax.f32 %v300, 0.0
    %vm304 = vcmask 523264
    %305 = vst.msk [vmem:[#allocation2] sm:$0xff] %vm304, %v303
    // Predicated region
    $region30: #{feat_l_kirc_forward.1} parent=1 // pred_check
      _
    $region31: #{feat_l_kirc_forward.1} parent=1 // pred_check_branch
      %307 = sbr.rel (0) target = $region33
    $region32: #{feat_l_kirc_forward.1} parent=1 // pred_region
      %s309 = ssub.s32 128, 128
      %310 = vsyncadd [#allocation3], %s309
      %s312 = sshll.u32 [#allocation2], 4
      %s313 = int_to_ptr.vmem [resolvable:$true] %s312
      %315 = dma.vmem_to_hbm [thread:$0]  %s313, 128, %s7, [#allocation3]
    $region33: #{feat_l_kirc_forward.1} parent=1 // pred_fallthru
      _
    // Predicated region
    $region34: #{feat_l_kirc_forward.1} parent=1 // pred_check
      _
    $region35: #{feat_l_kirc_forward.1} parent=1 // pred_check_branch
      %317 = sbr.rel (0) target = $region37
    $region36: #{feat_l_kirc_forward.1} parent=1 // pred_region
      %318 = dma.done [#allocation3], 128
    $region37: #{feat_l_kirc_forward.1} parent=1 // pred_fallthru
      _
    %319 = vsyncpa [#allocation3], 1

</llo_original>
